<compile_context>
chip_gen: v5e
topology: v5e:2x2
jax: 0.10.0
libtpu: 0.0.40
codegen_flags: <defaults>
</compile_context>

<pallas_src>
import functools

import jax
import jax.numpy as jnp
from jax import lax
from jax.experimental import pallas as pl
from jax.experimental.pallas import tpu as pltpu


# ----------------------------- Pallas kernel ------------------------------ #
def _bam_flash_kernel(n_valid, tile_k, mask_keys,
                      xq_ref, xk_ref, a_ref, wb_ref, wv_ref, bv_ref,
                      o_ref, tq_scr, m_scr, l_scr, acc_scr):
    """One (batch, query-tile, key-tile) grid step of BAM self-attention.

    xq_ref : (1, C, TQ)  query-side input columns (resident across key tiles)
    xk_ref : (1, C, TK)  key/value-side input columns for this key tile
    a_ref  : (C, C)      folded energy matrix  A  = scale * Wk^T Wq  (cdt)
    wb_ref : (C, 1)      folded key bias       wb = scale * Wk^T bq  (f32)
    wv_ref : (C, C)      value 1x1-conv weight (PyTorch (C_out,C_in), cdt)
    bv_ref : (C, 1)      value 1x1-conv bias (f32)
    o_ref  : (1, C, TQ)  attention output + residual (written on last key tile)
    scratch: tq_scr (C,TQ) cdt, m/l (1,TQ) f32, acc (C,TQ) f32
    Static:  n_valid (unpadded N), tile_k, mask_keys (whether N was padded).
    """
    ki = pl.program_id(2)
    cdt = a_ref.dtype                 # MXU operand dtype (bf16 by default)

    @pl.when(ki == 0)
    def _init():
        xq = xq_ref[0].astype(cdt)                                     # (C, TQ)
        tq_f32 = (jnp.dot(a_ref[...], xq, preferred_element_type=jnp.float32)
                  + wb_ref[...])                                       # A Xq + wb
        tq_scr[...] = tq_f32.astype(cdt)        # cast ONCE per query tile
        m_scr[...] = jnp.full_like(m_scr, -jnp.inf)
        l_scr[...] = jnp.zeros_like(l_scr)
        acc_scr[...] = jnp.zeros_like(acc_scr)

    xk = xk_ref[0].astype(cdt)                                         # (C, TK)

    # energy^T[j, i] = scale * q_i . k_j  (per-query constants dropped):
    #   e_t = Xk^T (A Xq + wb)  — NT matmul contracting over C (no explicit .T)
    e_t = lax.dot_general(xk, tq_scr[...],
                          (((0,), (0,)), ((), ())),
                          preferred_element_type=jnp.float32)          # (TK, TQ)

    if mask_keys:
        # Keys beyond the true (unpadded) N never contribute.
        key_idx = ki * tile_k + lax.broadcasted_iota(jnp.int32, e_t.shape, 0)
        e_t = jnp.where(key_idx < n_valid, e_t, -jnp.inf)

    # Online softmax over the key axis (axis 0): keys on sublanes, queries on
    # lanes.  Softmax state stays f32.
    m_prev = m_scr[...]                                                # (1, TQ)
    m_new = jnp.maximum(m_prev, jnp.max(e_t, axis=0, keepdims=True))
    alpha = jnp.exp(m_prev - m_new)                                    # (1, TQ)
    p = jnp.exp(e_t - m_new)                                           # (TK, TQ) f32
    l_scr[...] = alpha * l_scr[...] + jnp.sum(p, axis=0, keepdims=True)
    m_scr[...] = m_new

    # Deferred value projection: only accumulate Xk @ P here; Wv and bv are
    # applied once per query tile in the finalize (V@P = Wv(Xk@P) + bv*sum(P),
    # and sum(P)/l == 1 per query after normalisation).
    acc_scr[...] = alpha * acc_scr[...] + jnp.dot(
        xk, p.astype(cdt), preferred_element_type=jnp.float32)         # (C, TQ)

    @pl.when(ki == pl.num_programs(2) - 1)
    def _finalize():
        inv_l = pl.reciprocal(l_scr[...], approx=True)                 # EUP, ~free
        ctx = (acc_scr[...] * inv_l).astype(cdt)                       # sum_j att_j x_j
        out = (jnp.dot(wv_ref[...], ctx, preferred_element_type=jnp.float32)
               + bv_ref[...]                                           # sum_j att_j = 1
               + xq_ref[0].astype(jnp.float32))                        # residual (exact)
        o_ref[0] = out.astype(o_ref.dtype)


# ------------------------------- wrapper ----------------------------------- #
def _round_up(n, m):
    return ((n + m - 1) // m) * m


def _vmem_bytes_estimate(c, tq, tk, in_bytes, cdt_bytes):
    """Rough VMEM footprint for one grid step (double-buffered I/O + scratch)."""
    io = 2 * c * tq * in_bytes          # query tile (double-buffered)
    io += 2 * c * tk * in_bytes         # key/value tile (double-buffered)
    io += 2 * c * tq * in_bytes         # output tile (double-buffered)
    consts = 2 * (2 * c * c * cdt_bytes + 2 * c * 4)   # A, Wv, wb, bv (x2 buffers)
    scr = c * tq * cdt_bytes + c * tq * 4 + 2 * tq * 4
    tmp = 3 * tk * tq * 4 + 2 * c * max(tq, tk) * 4    # e_t / p / cast temporaries
    return io + consts + scr + tmp


def _pick_tiles(n_pad, c, in_bytes, cdt_bytes, budget):
    """Largest (TQ, TK) that divide the padded N and fit the VMEM budget."""
    for tq in (1024, 512, 256, 128):
        if n_pad % tq:
            continue
        for tk in (512, 256, 128):
            if n_pad % tk:
                continue
            if _vmem_bytes_estimate(c, tq, tk, in_bytes, cdt_bytes) <= budget:
                return tq, tk
    return 128, 128


def bam_pallas(x_bcn, params, *, tile_q=None, tile_k=None,
               compute_dtype=jnp.bfloat16, vmem_budget_bytes=24 * 2**20):
    """BAM self-attention (+ residual) over a (B, C, N) tensor.

    compute_dtype: MXU operand dtype (default bf16; accumulation / softmax
    state stays f32).  Pass None to use the input dtype for the operands.
    """
    B, C, N = x_bcn.shape
    out_dtype = x_bcn.dtype
    cdt = jnp.dtype(compute_dtype) if compute_dtype is not None else jnp.dtype(out_dtype)

    wq = params["wq"].astype(jnp.float32)            # (Ck, C)
    wk = params["wk"].astype(jnp.float32)            # (Ck, C)
    bq = params["bq"].astype(jnp.float32)            # (Ck,)
    scale = float(wq.shape[0]) ** -0.5

    # Fold Q/K projections so the MXU contracts over C instead of Ck = C // 8.
    a_m = (scale * (wk.T @ wq)).astype(cdt)                     # (C, C)
    wb = (scale * (wk.T @ bq)).reshape(C, 1).astype(jnp.float32)  # (C, 1)
    wv = params["wv"].astype(cdt)                               # (C, C)
    bv = params["bv"].astype(jnp.float32).reshape(C, 1)         # (C, 1)

    # Pad N up to a multiple of 128 (padded keys are masked in-kernel) so the
    # flash / bounded-VMEM structure and lane-dense stores hold for any N.
    n_pad = _round_up(N, 128)
    mask_keys = n_pad != N
    if mask_keys:
        x_bcn = jnp.pad(x_bcn, ((0, 0), (0, 0), (0, n_pad - N)))

    in_bytes = jnp.dtype(out_dtype).itemsize
    auto_tq, auto_tk = _pick_tiles(n_pad, C, in_bytes, cdt.itemsize,
                                   vmem_budget_bytes)
    tq = tile_q or auto_tq
    tk = tile_k or auto_tk
    assert n_pad % tq == 0 and n_pad % tk == 0

    grid = (B, n_pad // tq, n_pad // tk)
    kernel = functools.partial(_bam_flash_kernel, N, tk, mask_keys)

    # NOTE: the constant operands (A, wb, Wv, bv) could be single-buffered
    # (pipeline_mode=pl.Buffered(1)) and the key stream deep-buffered
    # (pl.Buffered(3)) for extra VMEM headroom / DMA hiding; left at the
    # defaults for portability across jax versions.
    out = pl.pallas_call(
        kernel,
        out_shape=jax.ShapeDtypeStruct((B, C, n_pad), out_dtype),
        grid_spec=pltpu.PrefetchScalarGridSpec(
            num_scalar_prefetch=0,
            grid=grid,
            in_specs=[
                pl.BlockSpec((1, C, tq), lambda b, qi, ki: (b, 0, qi)),  # x (query)
                pl.BlockSpec((1, C, tk), lambda b, qi, ki: (b, 0, ki)),  # x (key/val)
                pl.BlockSpec((C, C), lambda b, qi, ki: (0, 0)),          # A
                pl.BlockSpec((C, 1), lambda b, qi, ki: (0, 0)),          # wb
                pl.BlockSpec((C, C), lambda b, qi, ki: (0, 0)),          # Wv
                pl.BlockSpec((C, 1), lambda b, qi, ki: (0, 0)),          # bv
            ],
            out_specs=pl.BlockSpec((1, C, tq), lambda b, qi, ki: (b, 0, qi)),
            scratch_shapes=[
                pltpu.VMEM((C, tq), cdt),           # folded query tile  A Xq + wb
                pltpu.VMEM((1, tq), jnp.float32),   # running max
                pltpu.VMEM((1, tq), jnp.float32),   # running sum
                pltpu.VMEM((C, tq), jnp.float32),   # accumulator  Xk @ P
            ],
        ),
        compiler_params=pltpu.CompilerParams(
            dimension_semantics=("parallel", "parallel", "arbitrary"),
            vmem_limit_bytes=min(2 * vmem_budget_bytes, 56 * 2**20)),
    )(x_bcn, x_bcn, a_m, wb, wv, bv)

    if mask_keys:
        out = out[:, :, :N]
    return out


def cdsa_forward(x1, x2, params, ds=1, *, tile_q=None, tile_k=None,
                 compute_dtype=jnp.bfloat16):
    """CDSA.forward (mode='BAM'): concat along width, self-attention, split back."""
    # TODO(synk): ds > 1 (AvgPool2d downsample + F.interpolate upsample) and the
    # mode='PAM' branch are not implemented; CDSA defaults (ds=1, 'BAM') only.
    assert ds == 1
    width = x1.shape[3]
    x = jnp.concatenate((x1, x2), axis=3)              # (B, C, H, Wcat)
    B, C, H, Wcat = x.shape
    x_bcn = x.reshape(B, C, H * Wcat)                  # free reshape, no transpose
    out = bam_pallas(x_bcn, params, tile_q=tile_q, tile_k=tile_k,
                     compute_dtype=compute_dtype)
    out = out.reshape(B, C, H, Wcat)
    return out[:, :, :, :width], out[:, :, :, width:]


# -------------------------- deterministic params --------------------------- #
def init_cdsa_params(key, in_c):
    """BAM params in PyTorch conv orientation (C_out, C_in). weights_init:
    Conv weights ~ N(0, 0.02); conv biases keep PyTorch's default
    uniform(-1/sqrt(fan_in), 1/sqrt(fan_in)).  (BAM's `gamma` is unused.)"""
    ck = max(in_c // 8, 1)
    kq, kk, kv, kbq, kbk, kbv = jax.random.split(key, 6)
    std = 0.02
    bound = 1.0 / (in_c ** 0.5)
    return {
        "wq": std * jax.random.normal(kq, (ck, in_c), jnp.float32),
        "bq": jax.random.uniform(kbq, (ck,), jnp.float32, -bound, bound),
        "wk": std * jax.random.normal(kk, (ck, in_c), jnp.float32),
        "bk": jax.random.uniform(kbk, (ck,), jnp.float32, -bound, bound),
        "wv": std * jax.random.normal(kv, (in_c, in_c), jnp.float32),
        "bv": jax.random.uniform(kbv, (in_c,), jnp.float32, -bound, bound),
    }


# ----------------------------- pure-JAX reference -------------------------- #
def _cdsa_ref(x1, x2, params):
    """Unfused reference straight from the raw conv parameters (with biases)."""
    width = x1.shape[3]
    x = jnp.concatenate((x1, x2), axis=3)
    B, C, H, Wcat = x.shape
    N = H * Wcat
    xf = jnp.transpose(x.reshape(B, C, N), (0, 2, 1)).astype(jnp.float32)  # (B,N,C)
    q = xf @ params["wq"].T + params["bq"]
    k = xf @ params["wk"].T + params["bk"]
    v = xf @ params["wv"].T + params["bv"]
    ck = params["wq"].shape[0]
    energy = jnp.einsum("bic,bjc->bij", q, k) * (float(ck) ** -0.5)
    att = jax.nn.softmax(energy, axis=-1)
    out = jnp.einsum("bij,bjc->bic", att, v) + xf
    out = jnp.transpose(out, (0, 2, 1)).reshape(B, C, H, Wcat)
    return out[:, :, :, :width], out[:, :, :, width:]


# --------------------------------- main ------------------------------------ #
if __name__ == "__main__":
    key = jax.random.PRNGKey(0)
    k1, k2, kp, k3, k4, kp2, k5, k6, kp3 = jax.random.split(key, 9)

    # Tolerance budget: bf16 MXU operands (f32 accumulation) + approximate EUP
    # reciprocal in the softmax normalisation + folded A = scale*Wk^T*Wq.
    TOL = 5e-3

    # ---- test 1: single attention tile (N = 8*16 = 128) ----
    B, C, H, W = 2, 16, 8, 8                 # in_c=16 -> key_channels = 2
    x1 = jax.random.normal(k1, (B, C, H, W), jnp.float32)
    x2 = jax.random.normal(k2, (B, C, H, W), jnp.float32)
    params = init_cdsa_params(kp, C)

    y1, y2 = cdsa_forward(x1, x2, params)
    jax.block_until_ready((y1, y2))
    r1, r2 = _cdsa_ref(x1, x2, params)
    assert y1.shape == (B, C, H, W) and y2.shape == (B, C, H, W)
    assert jnp.allclose(y1, r1, atol=TOL, rtol=TOL)
    assert jnp.allclose(y2, r2, atol=TOL, rtol=TOL)

    # ---- test 2: multi-tile flash path (N = 8*32 = 256, forced 128 tiles) ----
    B2, C2, H2, W2 = 2, 32, 8, 16
    xa = jax.random.normal(k3, (B2, C2, H2, W2), jnp.float32)
    xb = jax.random.normal(k4, (B2, C2, H2, W2), jnp.float32)
    params2 = init_cdsa_params(kp2, C2)
    z1, z2 = cdsa_forward(xa, xb, params2, tile_q=128, tile_k=128)
    jax.block_until_ready((z1, z2))
    s1, s2 = _cdsa_ref(xa, xb, params2)
    assert z1.shape == (B2, C2, H2, W2) and z2.shape == (B2, C2, H2, W2)
    assert jnp.allclose(z1, s1, atol=TOL, rtol=TOL)
    assert jnp.allclose(z2, s2, atol=TOL, rtol=TOL)

    # ---- test 3: N not a multiple of 128 (padded + masked keys path) ----
    B3, C3, H3, W3 = 2, 16, 6, 5             # N = 6 * 10 = 60 -> padded to 128
    xc = jax.random.normal(k5, (B3, C3, H3, W3), jnp.float32)
    xd = jax.random.normal(k6, (B3, C3, H3, W3), jnp.float32)
    params3 = init_cdsa_params(kp3, C3)
    w1, w2 = cdsa_forward(xc, xd, params3)
    jax.block_until_ready((w1, w2))
    t1, t2 = _cdsa_ref(xc, xd, params3)
    assert w1.shape == (B3, C3, H3, W3) and w2.shape == (B3, C3, H3, W3)
    assert jnp.allclose(w1, t1, atol=TOL, rtol=TOL)
    assert jnp.allclose(w2, t2, atol=TOL, rtol=TOL)

    print("KERNEL_OK")
</pallas_src>

<mosaic_0001>
module attributes {stable_mosaic.version = 11 : i64} {
  func.func @_bam_flash_kernel(%arg0: i32, %arg1: i32, %arg2: i32, %arg3: memref<1x16x128xf32, #tpu.memory_space<vmem>>, %arg4: memref<1x16x128xf32, #tpu.memory_space<vmem>>, %arg5: memref<16x16xbf16, #tpu.memory_space<vmem>>, %arg6: memref<16x1xf32, #tpu.memory_space<vmem>>, %arg7: memref<16x16xbf16, #tpu.memory_space<vmem>>, %arg8: memref<16x1xf32, #tpu.memory_space<vmem>>, %arg9: memref<1x16x128xf32, #tpu.memory_space<vmem>>, %arg10: memref<16x128xbf16, #tpu.memory_space<vmem>>, %arg11: memref<1x128xf32, #tpu.memory_space<vmem>>, %arg12: memref<1x128xf32, #tpu.memory_space<vmem>>, %arg13: memref<16x128xf32, #tpu.memory_space<vmem>>) attributes {dimension_semantics = [#tpu.dimension_semantics<parallel>, #tpu.dimension_semantics<parallel>, #tpu.dimension_semantics<arbitrary>], iteration_bounds = array<i64: 2, 1, 1>, scalar_prefetch = 0 : i64, scratch_operands = 4 : i64, tpu.core_type = #tpu.core_type<tc>, window_params = [{transform_indices = @transform_0, window_bounds = array<i64: 1, 16, 128>}, {transform_indices = @transform_1, window_bounds = array<i64: 1, 16, 128>}, {pipeline_mode = #tpu.pipeline_mode<synchronous>, transform_indices = @transform_2, window_bounds = array<i64: 16, 16>}, {pipeline_mode = #tpu.pipeline_mode<synchronous>, transform_indices = @transform_3, window_bounds = array<i64: 16, 1>}, {pipeline_mode = #tpu.pipeline_mode<synchronous>, transform_indices = @transform_4, window_bounds = array<i64: 16, 16>}, {pipeline_mode = #tpu.pipeline_mode<synchronous>, transform_indices = @transform_5, window_bounds = array<i64: 16, 1>}, {transform_indices = @transform_6, window_bounds = array<i64: 1, 16, 128>}]} {
    %c0_i32 = arith.constant 0 : i32
    %0 = arith.cmpi eq, %arg2, %c0_i32 : i32
    %1 = arith.extui %0 : i1 to i32
    %c0_i32_0 = arith.constant 0 : i32
    %2 = arith.cmpi ne, %1, %c0_i32_0 : i32
    scf.if %2 {
      %c0_22 = arith.constant 0 : index
      %c0_23 = arith.constant 0 : index
      %c0_24 = arith.constant 0 : index
      %34 = vector.load %arg3[%c0_22, %c0_23, %c0_24] : memref<1x16x128xf32, #tpu.memory_space<vmem>>, vector<1x16x128xf32>
      %35 = vector.shape_cast %34 : vector<1x16x128xf32> to vector<16x128xf32>
      %36 = arith.truncf %35 : vector<16x128xf32> to vector<16x128xbf16>
      %c0_25 = arith.constant 0 : index
      %c0_26 = arith.constant 0 : index
      %37 = vector.load %arg5[%c0_25, %c0_26] : memref<16x16xbf16, #tpu.memory_space<vmem>>, vector<16x16xbf16>
      %cst_27 = arith.constant dense<0.000000e+00> : vector<16x128xf32>
      %38 = tpu.matmul %37, %36, %cst_27 {dimension_numbers = #tpu.dot_dimension_numbers<[1], [0], [0], [1], [0, 0, 1, 1], [], []>} : vector<16x16xbf16>, vector<16x128xbf16>, vector<16x128xf32> -> vector<16x128xf32>
      %c0_28 = arith.constant 0 : index
      %c0_29 = arith.constant 0 : index
      %39 = vector.load %arg6[%c0_28, %c0_29] : memref<16x1xf32, #tpu.memory_space<vmem>>, vector<16x1xf32>
      %40 = vector.broadcast %39 : vector<16x1xf32> to vector<16x128xf32>
      %41 = arith.addf %38, %40 : vector<16x128xf32>
      %42 = arith.truncf %41 : vector<16x128xf32> to vector<16x128xbf16>
      %c0_30 = arith.constant 0 : index
      %c0_31 = arith.constant 0 : index
      %43 = vector.load %arg10[%c0_30, %c0_31] : memref<16x128xbf16, #tpu.memory_space<vmem>>, vector<16x128xbf16>
      tpu.vector_store %arg10[%c0_30, %c0_31], %42 {strides = array<i32>} : memref<16x128xbf16, #tpu.memory_space<vmem>>, vector<16x128xbf16>,
      %cst_32 = arith.constant 0xFF800000 : f32
      %44 = vector.broadcast %cst_32 : f32 to vector<1x128xf32>
      %c0_33 = arith.constant 0 : index
      %c0_34 = arith.constant 0 : index
      %45 = vector.load %arg11[%c0_33, %c0_34] : memref<1x128xf32, #tpu.memory_space<vmem>>, vector<1x128xf32>
      tpu.vector_store %arg11[%c0_33, %c0_34], %44 {strides = array<i32>} : memref<1x128xf32, #tpu.memory_space<vmem>>, vector<1x128xf32>,
      %cst_35 = arith.constant 0.000000e+00 : f32
      %46 = vector.broadcast %cst_35 : f32 to vector<1x128xf32>
      %c0_36 = arith.constant 0 : index
      %c0_37 = arith.constant 0 : index
      %47 = vector.load %arg12[%c0_36, %c0_37] : memref<1x128xf32, #tpu.memory_space<vmem>>, vector<1x128xf32>
      tpu.vector_store %arg12[%c0_36, %c0_37], %46 {strides = array<i32>} : memref<1x128xf32, #tpu.memory_space<vmem>>, vector<1x128xf32>,
      %cst_38 = arith.constant 0.000000e+00 : f32
      %48 = vector.broadcast %cst_38 : f32 to vector<16x128xf32>
      %c0_39 = arith.constant 0 : index
      %c0_40 = arith.constant 0 : index
      %49 = vector.load %arg13[%c0_39, %c0_40] : memref<16x128xf32, #tpu.memory_space<vmem>>, vector<16x128xf32>
      tpu.vector_store %arg13[%c0_39, %c0_40], %48 {strides = array<i32>} : memref<16x128xf32, #tpu.memory_space<vmem>>, vector<16x128xf32>,
    } else {
    }
    %c0 = arith.constant 0 : index
    %c0_1 = arith.constant 0 : index
    %c0_2 = arith.constant 0 : index
    %3 = vector.load %arg4[%c0, %c0_1, %c0_2] : memref<1x16x128xf32, #tpu.memory_space<vmem>>, vector<1x16x128xf32>
    %4 = vector.shape_cast %3 : vector<1x16x128xf32> to vector<16x128xf32>
    %5 = arith.truncf %4 : vector<16x128xf32> to vector<16x128xbf16>
    %c0_3 = arith.constant 0 : index
    %c0_4 = arith.constant 0 : index
    %6 = vector.load %arg10[%c0_3, %c0_4] : memref<16x128xbf16, #tpu.memory_space<vmem>>, vector<16x128xbf16>
    %cst = arith.constant dense<0.000000e+00> : vector<128x128xf32>
    %7 = tpu.matmul %5, %6, %cst {dimension_numbers = #tpu.dot_dimension_numbers<[0], [0], [1], [1], [0, 1, 1, 1], [], []>} : vector<16x128xbf16>, vector<16x128xbf16>, vector<128x128xf32> -> vector<128x128xf32>
    %c0_5 = arith.constant 0 : index
    %c0_6 = arith.constant 0 : index
    %8 = vector.load %arg11[%c0_5, %c0_6] : memref<1x128xf32, #tpu.memory_space<vmem>>, vector<1x128xf32>
    %cst_7 = arith.constant dense<0xFF800000> : vector<128xf32>
    %9 = vector.multi_reduction <maximumf>, %7, %cst_7 [0] : vector<128x128xf32> to vector<128xf32>
    %10 = vector.shape_cast %9 : vector<128xf32> to vector<1x128xf32>
    %11 = arith.maximumf %8, %10 : vector<1x128xf32>
    %12 = arith.subf %8, %11 : vector<1x128xf32>
    %13 = math.exp %12 : vector<1x128xf32>
    %14 = vector.broadcast %11 : vector<1x128xf32> to vector<128x128xf32>
    %15 = arith.subf %7, %14 : vector<128x128xf32>
    %16 = math.exp %15 : vector<128x128xf32>
    %c0_8 = arith.constant 0 : index
    %c0_9 = arith.constant 0 : index
    %17 = vector.load %arg12[%c0_8, %c0_9] : memref<1x128xf32, #tpu.memory_space<vmem>>, vector<1x128xf32>
    %18 = arith.mulf %13, %17 : vector<1x128xf32>
    %cst_10 = arith.constant dense<0.000000e+00> : vector<128xf32>
    %19 = vector.multi_reduction <add>, %16, %cst_10 [0] : vector<128x128xf32> to vector<128xf32>
    %20 = vector.shape_cast %19 : vector<128xf32> to vector<1x128xf32>
    %21 = arith.addf %18, %20 : vector<1x128xf32>
    %c0_11 = arith.constant 0 : index
    %c0_12 = arith.constant 0 : index
    %22 = vector.load %arg12[%c0_11, %c0_12] : memref<1x128xf32, #tpu.memory_space<vmem>>, vector<1x128xf32>
    tpu.vector_store %arg12[%c0_11, %c0_12], %21 {strides = array<i32>} : memref<1x128xf32, #tpu.memory_space<vmem>>, vector<1x128xf32>,
    %c0_13 = arith.constant 0 : index
    %c0_14 = arith.constant 0 : index
    %23 = vector.load %arg11[%c0_13, %c0_14] : memref<1x128xf32, #tpu.memory_space<vmem>>, vector<1x128xf32>
    tpu.vector_store %arg11[%c0_13, %c0_14], %11 {strides = array<i32>} : memref<1x128xf32, #tpu.memory_space<vmem>>, vector<1x128xf32>,
    %c0_15 = arith.constant 0 : index
    %c0_16 = arith.constant 0 : index
    %24 = vector.load %arg13[%c0_15, %c0_16] : memref<16x128xf32, #tpu.memory_space<vmem>>, vector<16x128xf32>
    %25 = vector.broadcast %13 : vector<1x128xf32> to vector<16x128xf32>
    %26 = arith.mulf %25, %24 : vector<16x128xf32>
    %27 = arith.truncf %16 : vector<128x128xf32> to vector<128x128xbf16>
    %cst_17 = arith.constant dense<0.000000e+00> : vector<16x128xf32>
    %28 = tpu.matmul %5, %27, %cst_17 {dimension_numbers = #tpu.dot_dimension_numbers<[1], [0], [0], [1], [0, 0, 1, 1], [], []>} : vector<16x128xbf16>, vector<128x128xbf16>, vector<16x128xf32> -> vector<16x128xf32>
    %29 = arith.addf %26, %28 : vector<16x128xf32>
    %c0_18 = arith.constant 0 : index
    %c0_19 = arith.constant 0 : index
    %30 = vector.load %arg13[%c0_18, %c0_19] : memref<16x128xf32, #tpu.memory_space<vmem>>, vector<16x128xf32>
    tpu.vector_store %arg13[%c0_18, %c0_19], %29 {strides = array<i32>} : memref<16x128xf32, #tpu.memory_space<vmem>>, vector<16x128xf32>,
    %c0_i32_20 = arith.constant 0 : i32
    %31 = arith.cmpi eq, %arg2, %c0_i32_20 : i32
    %32 = arith.extui %31 : i1 to i32
    %c0_i32_21 = arith.constant 0 : i32
    %33 = arith.cmpi ne, %32, %c0_i32_21 : i32
    scf.if %33 {
      %c0_22 = arith.constant 0 : index
      %c0_23 = arith.constant 0 : index
      %34 = vector.load %arg12[%c0_22, %c0_23] : memref<1x128xf32, #tpu.memory_space<vmem>>, vector<1x128xf32>
      %35 = tpu.reciprocal %34 {approx = true} : vector<1x128xf32> -> vector<1x128xf32>
      %c0_24 = arith.constant 0 : index
      %c0_25 = arith.constant 0 : index
      %36 = vector.load %arg13[%c0_24, %c0_25] : memref<16x128xf32, #tpu.memory_space<vmem>>, vector<16x128xf32>
      %37 = vector.broadcast %35 : vector<1x128xf32> to vector<16x128xf32>
      %38 = arith.mulf %36, %37 : vector<16x128xf32>
      %39 = arith.truncf %38 : vector<16x128xf32> to vector<16x128xbf16>
      %c0_26 = arith.constant 0 : index
      %c0_27 = arith.constant 0 : index
      %40 = vector.load %arg7[%c0_26, %c0_27] : memref<16x16xbf16, #tpu.memory_space<vmem>>, vector<16x16xbf16>
      %cst_28 = arith.constant dense<0.000000e+00> : vector<16x128xf32>
      %41 = tpu.matmul %40, %39, %cst_28 {dimension_numbers = #tpu.dot_dimension_numbers<[1], [0], [0], [1], [0, 0, 1, 1], [], []>} : vector<16x16xbf16>, vector<16x128xbf16>, vector<16x128xf32> -> vector<16x128xf32>
      %c0_29 = arith.constant 0 : index
      %c0_30 = arith.constant 0 : index
      %42 = vector.load %arg8[%c0_29, %c0_30] : memref<16x1xf32, #tpu.memory_space<vmem>>, vector<16x1xf32>
      %43 = vector.broadcast %42 : vector<16x1xf32> to vector<16x128xf32>
      %44 = arith.addf %41, %43 : vector<16x128xf32>
      %c0_31 = arith.constant 0 : index
      %c0_32 = arith.constant 0 : index
      %c0_33 = arith.constant 0 : index
      %45 = vector.load %arg3[%c0_31, %c0_32, %c0_33] : memref<1x16x128xf32, #tpu.memory_space<vmem>>, vector<1x16x128xf32>
      %46 = vector.shape_cast %45 : vector<1x16x128xf32> to vector<16x128xf32>
      %47 = arith.addf %44, %46 : vector<16x128xf32>
      %c0_34 = arith.constant 0 : index
      %c0_35 = arith.constant 0 : index
      %c0_36 = arith.constant 0 : index
      %48 = vector.load %arg9[%c0_34, %c0_35, %c0_36] : memref<1x16x128xf32, #tpu.memory_space<vmem>>, vector<1x16x128xf32>
      %49 = vector.shape_cast %48 : vector<1x16x128xf32> to vector<16x128xf32>
      %50 = vector.shape_cast %47 : vector<16x128xf32> to vector<1x16x128xf32>
      tpu.vector_store %arg9[%c0_34, %c0_35, %c0_36], %50 {strides = array<i32>} : memref<1x16x128xf32, #tpu.memory_space<vmem>>, vector<1x16x128xf32>,
    } else {
    }
    return
  }
  func.func @transform_0(%arg0: i32, %arg1: i32, %arg2: i32) -> (i32, i32, i32) {
    %c0_i32 = arith.constant 0 : i32
    %c0_i32_0 = arith.constant 0 : i32
    return %arg0, %c0_i32, %arg1 : i32, i32, i32
  }
  func.func @transform_1(%arg0: i32, %arg1: i32, %arg2: i32) -> (i32, i32, i32) {
    %c0_i32 = arith.constant 0 : i32
    %c0_i32_0 = arith.constant 0 : i32
    return %arg0, %c0_i32, %arg2 : i32, i32, i32
  }
  func.func @transform_2(%arg0: i32, %arg1: i32, %arg2: i32) -> (i32, i32) {
    %c0_i32 = arith.constant 0 : i32
    %c0_i32_0 = arith.constant 0 : i32
    %c0_i32_1 = arith.constant 0 : i32
    return %c0_i32, %c0_i32_0 : i32, i32
  }
  func.func @transform_3(%arg0: i32, %arg1: i32, %arg2: i32) -> (i32, i32) {
    %c0_i32 = arith.constant 0 : i32
    %c0_i32_0 = arith.constant 0 : i32
    %c0_i32_1 = arith.constant 0 : i32
    return %c0_i32, %c0_i32_0 : i32, i32
  }
  func.func @transform_4(%arg0: i32, %arg1: i32, %arg2: i32) -> (i32, i32) {
    %c0_i32 = arith.constant 0 : i32
    %c0_i32_0 = arith.constant 0 : i32
    %c0_i32_1 = arith.constant 0 : i32
    return %c0_i32, %c0_i32_0 : i32, i32
  }
  func.func @transform_5(%arg0: i32, %arg1: i32, %arg2: i32) -> (i32, i32) {
    %c0_i32 = arith.constant 0 : i32
    %c0_i32_0 = arith.constant 0 : i32
    %c0_i32_1 = arith.constant 0 : i32
    return %c0_i32, %c0_i32_0 : i32, i32
  }
  func.func @transform_6(%arg0: i32, %arg1: i32, %arg2: i32) -> (i32, i32, i32) {
    %c0_i32 = arith.constant 0 : i32
    %c0_i32_0 = arith.constant 0 : i32
    return %arg0, %c0_i32, %arg1 : i32, i32, i32
  }
}

</mosaic_0001>

<llo_original>
// kernel: tpu_custom_call.1
$region0: #{tpu_custom_call.1}
  #allocation0 [shape = 'u32[]', space=smem, size = 0x4, offset = 0x4, fixed_abs, tag = 'smem constant byte address 0x4 - core index']
  #allocation1 [shape = 'u32[72,128]{1,0:T(1,128)}', space=vmem, size = 0x9000, scoped, tag = 'internal scratch']
  #allocation2 [shape = 'bf16[16,128]{1,0:T(8,128)(2,1)}', space=vmem, size = 0x1000, scoped, tag = 'scratch operand']
  #allocation3 [shape = 'f32[1,128]{1,0:T(1,128)}', space=vmem, size = 0x200, scoped, tag = 'scratch operand']
  #allocation4 [shape = 'f32[1,128]{1,0:T(1,128)}', space=vmem, size = 0x200, scoped, tag = 'scratch operand']
  #allocation5 [shape = 'f32[16,128]{1,0:T(8,128)}', space=vmem, size = 0x2000, scoped, tag = 'scratch operand']
  %s0 = inlined_call_operand.vmem [shape: f32[2,16,128], index: 0, kind: input, shape index: {}]
  %s1 = inlined_call_operand.hbm [shape: f32[2,16,128], index: 1, kind: input, shape index: {}]
  %s2 = inlined_call_operand.hbm [shape: bf16[16,16], index: 2, kind: input, shape index: {}]
  %s3 = inlined_call_operand.vmem [shape: f32[16,1], index: 3, kind: input, shape index: {}]
  %s4 = inlined_call_operand.hbm [shape: bf16[16,16], index: 4, kind: input, shape index: {}]
  %s5 = inlined_call_operand.vmem [shape: f32[16,1], index: 5, kind: input, shape index: {}]
  %s6 = inlined_call_operand.hbm [shape: f32[2,16,128], index: 6, kind: output, shape index: {}]
  %s7 = sld [smem:[#allocation0]]
  $region77: #{tpu_custom_call.1} parent=0
    _
  %s9 = ssub.s32 1, %s7
  %s10 = scalar_select 0, %s9, %s7
  $region1: #{tpu_custom_call.1} parent=0
    #allocation6 [shape = 'u8[16384]{0}', space=vmem, size = 0x4000, scoped, tag = 'input window, operand 1']
    #allocation7 [shape = 's32[2]{0}', space=sflag, size = 0x8, scoped, tag = 'scoped memory for tpu_custom_call.1']
    #allocation8 [shape = 's32[2]{0}', space=sflag, size = 0x8, scoped, tag = 'scoped memory for tpu_custom_call.1']
    #allocation9 [shape = 'u8[4096]{0}', space=vmem, size = 0x1000, scoped, tag = 'input window, operand 2, single buffered']
    #allocation10 [shape = 's32[1]{0}', space=sflag, size = 0x4, scoped, tag = 'scoped memory for tpu_custom_call.1']
    #allocation11 [shape = 'u8[4096]{0}', space=vmem, size = 0x1000, scoped, tag = 'input window, operand 4, single buffered']
    #allocation12 [shape = 'u8[16384]{0}', space=vmem, size = 0x4000, scoped, tag = 'output window, operand 0']
    %11 = vsyncpa [#allocation7], 0
    %s12 = scalar_lea.sflag [#allocation7], 1
    %13 = vsyncpa %s12, 0
    %14 = vsyncpa [#allocation10], 0
    %15 = vsyncpa [#allocation8], 0
    %s16 = scalar_lea.sflag [#allocation8], 1
    %17 = vsyncpa %s16, 0
    loop: start=0, step=1, limit=4
    $region2: #{tpu_custom_call.1} parent=1 // loop_pre_header
      _
    $region3: #{tpu_custom_call.1} parent=1 // loop_header
      %s19 = sphi 0, %s23
      %p20 = scmp.ge.s32.totalorder %s19, 4
      %s26 = sphi 0, %s45
      %s27 = sphi 0, %s41
      %s28 = sphi 0, %s37
      %s29 = sphi 0, %s26
      %s30 = sphi 0, %s27
      %s31 = sphi 0, %s28
      %s32 = sphi 0, %s29
      %s33 = sphi 0, %s30
      %s34 = sphi 0, %s31
      %s50 = sphi 0, %s52
      %s53 = sphi 0, %s50
      %s54 = sphi 0, %s53
      %s70 = sphi 0, %s54
      %s78 = sphi 0, %s80
      %s81 = sphi 0, %s78
      %s82 = sphi 0, %s81
      %s98 = sphi 0, %s82
      %s102 = sphi 0, %s102
      %s104 = sphi 0, %s102
      %s105 = sphi 0, %s104
      %s119 = sphi 0, %s105
      %s123 = sphi 0, %s123
      %s125 = sphi 0, %s123
      %s126 = sphi 0, %s125
      %s140 = sphi 0, %s126
      %s144 = sphi 0, %s144
      %s146 = sphi 0, %s144
      %s147 = sphi 0, %s146
      %s161 = sphi 0, %s147
      %s165 = sphi 0, %s165
      %s167 = sphi 0, %s165
      %s168 = sphi 0, %s167
      %s182 = sphi 0, %s168
      %s190 = sphi 0, %s192
      %s193 = sphi 0, %s190
      %s194 = sphi 0, %s193
      %s210 = sphi 0, %s194
    $region4: #{tpu_custom_call.1} parent=1 // loop_header_branch
      %22 = sbr.rel (%p20) target = $region8
    $region5: #{tpu_custom_call.1} parent=1 // loop_body
      %s24 = ssub.s32 %s19, 1
      %s25 = ssub.s32 %s19, 2
      %s35 = sadd.s32 1, %s28
      %p36 = scmp.ge.s32.totalorder %s35, 1
      %s37 = scalar_select %p36, 0, %s35
      %s38 = sadd.s32 1, %s27
      %s39 = scalar_select %p36, %s38, %s27
      %p40 = scmp.ge.s32.totalorder %s39, 1
      %s41 = scalar_select %p40, 0, %s39
      %s42 = sadd.s32 1, %s26
      %s43 = scalar_select %p40, %s42, %s26
      %p44 = scmp.ge.s32.totalorder %s43, 2
      %s45 = scalar_select %p44, 0, %s43
      %s46 = ssub.s32 %s26, %s45
      %s47 = ssub.s32 %s27, %s41
      %s48 = sor.u32 %s46, %s47
      %p49 = scmp.eq.s32.totalorder %s48, 0
      %s51 = sadd.s32 %s50, 1
      %s52 = scalar_select %p49, %s50, %s51
      %p55 = pneg %p49
      %p56 = scmp.eq.s32.totalorder %s19, 1
      %p57 = por %p55, %p56
      %p58 = scmp.ne.s32.totalorder %s50, %s53
      %p59 = scmp.eq.s32.totalorder %s19, 0
      %p60 = por %p58, %p59
      %p61 = scmp.ne.s32.totalorder %s50, %s53
      %p62 = scmp.eq.s32.totalorder %s24, 1
      %p63 = por %p61, %p62
      %p64 = scmp.ne.s32.totalorder %s53, %s54
      %p65 = scmp.eq.s32.totalorder %s24, 0
      %p66 = por %p64, %p65
      %p67 = scmp.ne.s32.totalorder %s53, %s54
      %p68 = scmp.eq.s32.totalorder %s25, 1
      %p69 = por %p67, %p68
      %p71 = scmp.ne.s32.totalorder %s54, %s70
      %p72 = scmp.eq.s32.totalorder %s25, 0
      %p73 = por %p71, %p72
      %s74 = ssub.s32 %s26, %s45
      %s75 = ssub.s32 %s28, %s37
      %s76 = sor.u32 %s74, %s75
      %p77 = scmp.eq.s32.totalorder %s76, 0
      %s79 = sadd.s32 %s78, 1
      %s80 = scalar_select %p77, %s78, %s79
      %p83 = pneg %p77
      %p84 = scmp.eq.s32.totalorder %s19, 1
      %p85 = por %p83, %p84
      %p86 = scmp.ne.s32.totalorder %s78, %s81
      %p87 = scmp.eq.s32.totalorder %s19, 0
      %p88 = por %p86, %p87
      %p89 = scmp.ne.s32.totalorder %s78, %s81
      %p90 = scmp.eq.s32.totalorder %s24, 1
      %p91 = por %p89, %p90
      %p92 = scmp.ne.s32.totalorder %s81, %s82
      %p93 = scmp.eq.s32.totalorder %s24, 0
      %p94 = por %p92, %p93
      %p95 = scmp.ne.s32.totalorder %s81, %s82
      %p96 = scmp.eq.s32.totalorder %s25, 1
      %p97 = por %p95, %p96
      %p99 = scmp.ne.s32.totalorder %s82, %s98
      %p100 = scmp.eq.s32.totalorder %s25, 0
      %p101 = por %p99, %p100
      %s103 = sadd.s32 %s102, 1
      %p106 = scmp.eq.s32.totalorder %s19, 1
      %p107 = scmp.ne.s32.totalorder %s102, %s104
      %p108 = scmp.eq.s32.totalorder %s19, 0
      %p109 = por %p107, %p108
      %p110 = scmp.ne.s32.totalorder %s102, %s104
      %p111 = scmp.eq.s32.totalorder %s24, 1
      %p112 = por %p110, %p111
      %p113 = scmp.ne.s32.totalorder %s104, %s105
      %p114 = scmp.eq.s32.totalorder %s24, 0
      %p115 = por %p113, %p114
      %p116 = scmp.ne.s32.totalorder %s104, %s105
      %p117 = scmp.eq.s32.totalorder %s25, 1
      %p118 = por %p116, %p117
      %p120 = scmp.ne.s32.totalorder %s105, %s119
      %p121 = scmp.eq.s32.totalorder %s25, 0
      %p122 = por %p120, %p121
      %s124 = sadd.s32 %s123, 1
      %p127 = scmp.eq.s32.totalorder %s19, 1
      %p128 = scmp.ne.s32.totalorder %s123, %s125
      %p129 = scmp.eq.s32.totalorder %s19, 0
      %p130 = por %p128, %p129
      %p131 = scmp.ne.s32.totalorder %s123, %s125
      %p132 = scmp.eq.s32.totalorder %s24, 1
      %p133 = por %p131, %p132
      %p134 = scmp.ne.s32.totalorder %s125, %s126
      %p135 = scmp.eq.s32.totalorder %s24, 0
      %p136 = por %p134, %p135
      %p137 = scmp.ne.s32.totalorder %s125, %s126
      %p138 = scmp.eq.s32.totalorder %s25, 1
      %p139 = por %p137, %p138
      %p141 = scmp.ne.s32.totalorder %s126, %s140
      %p142 = scmp.eq.s32.totalorder %s25, 0
      %p143 = por %p141, %p142
      %s145 = sadd.s32 %s144, 1
      %p148 = scmp.eq.s32.totalorder %s19, 1
      %p149 = scmp.ne.s32.totalorder %s144, %s146
      %p150 = scmp.eq.s32.totalorder %s19, 0
      %p151 = por %p149, %p150
      %p152 = scmp.ne.s32.totalorder %s144, %s146
      %p153 = scmp.eq.s32.totalorder %s24, 1
      %p154 = por %p152, %p153
      %p155 = scmp.ne.s32.totalorder %s146, %s147
      %p156 = scmp.eq.s32.totalorder %s24, 0
      %p157 = por %p155, %p156
      %p158 = scmp.ne.s32.totalorder %s146, %s147
      %p159 = scmp.eq.s32.totalorder %s25, 1
      %p160 = por %p158, %p159
      %p162 = scmp.ne.s32.totalorder %s147, %s161
      %p163 = scmp.eq.s32.totalorder %s25, 0
      %p164 = por %p162, %p163
      %s166 = sadd.s32 %s165, 1
      %p169 = scmp.eq.s32.totalorder %s19, 1
      %p170 = scmp.ne.s32.totalorder %s165, %s167
      %p171 = scmp.eq.s32.totalorder %s19, 0
      %p172 = por %p170, %p171
      %p173 = scmp.ne.s32.totalorder %s165, %s167
      %p174 = scmp.eq.s32.totalorder %s24, 1
      %p175 = por %p173, %p174
      %p176 = scmp.ne.s32.totalorder %s167, %s168
      %p177 = scmp.eq.s32.totalorder %s24, 0
      %p178 = por %p176, %p177
      %p179 = scmp.ne.s32.totalorder %s167, %s168
      %p180 = scmp.eq.s32.totalorder %s25, 1
      %p181 = por %p179, %p180
      %p183 = scmp.ne.s32.totalorder %s168, %s182
      %p184 = scmp.eq.s32.totalorder %s25, 0
      %p185 = por %p183, %p184
      %s186 = ssub.s32 %s26, %s45
      %s187 = ssub.s32 %s27, %s41
      %s188 = sor.u32 %s186, %s187
      %p189 = scmp.eq.s32.totalorder %s188, 0
      %s191 = sadd.s32 %s190, 1
      %s192 = scalar_select %p189, %s190, %s191
      %p195 = pneg %p189
      %p196 = scmp.eq.s32.totalorder %s19, 1
      %p197 = por %p195, %p196
      %p198 = scmp.ne.s32.totalorder %s190, %s193
      %p199 = scmp.eq.s32.totalorder %s19, 0
      %p200 = por %p198, %p199
      %p201 = scmp.ne.s32.totalorder %s190, %s193
      %p202 = scmp.eq.s32.totalorder %s24, 1
      %p203 = por %p201, %p202
      %p204 = scmp.ne.s32.totalorder %s193, %s194
      %p205 = scmp.eq.s32.totalorder %s24, 0
      %p206 = por %p204, %p205
      %p207 = scmp.ne.s32.totalorder %s193, %s194
      %p208 = scmp.eq.s32.totalorder %s25, 1
      %p209 = por %p207, %p208
      %p211 = scmp.ne.s32.totalorder %s194, %s210
      %p212 = scmp.eq.s32.totalorder %s25, 0
      %p213 = por %p211, %p212
      %p214 = scmp.le.s32.totalorder 1, %s19
      %p215 = scmp.lt.s32.totalorder %s19, 3
      %p216 = pnand %p214, %p215
      %p217 = pneg %p216
      // Predicated region
      $region9: #{tpu_custom_call.1} parent=5 // pred_check
        _
      $region10: #{tpu_custom_call.1} parent=5 // pred_check_branch
        %219 = sbr.rel (%p216) target = $region12
      $region11: #{tpu_custom_call.1} parent=5 // pred_region
        %s220 = ssub.s32 %s19, 1
        // Predicated region
        $region13: #{tpu_custom_call.1} parent=11 // pred_check
          %p221 = pneg %p115
        $region14: #{tpu_custom_call.1} parent=11 // pred_check_branch
          %223 = sbr.rel (%p221) target = $region16
        $region15: #{tpu_custom_call.1} parent=11 // pred_region
          %225 = vsyncadd [#allocation10], 0
          %s226 = sshll.u32 %s2, 4
          %s227 = int_to_ptr.hbm [resolvable:$true] %s226
          %s228 = sshll.u32 [#allocation9], 4
          %s229 = int_to_ptr.vmem [resolvable:$true] %s228
          %234 = dma.hbm_to_vmem [thread:$0]  %s227, 128, %s229, [#allocation10], 64, 64, 4
        $region16: #{tpu_custom_call.1} parent=11 // pred_fallthru
          _
        // Predicated region
        $region17: #{tpu_custom_call.1} parent=11 // pred_check
          %p235 = pneg %p136
        $region18: #{tpu_custom_call.1} parent=11 // pred_check_branch
          %237 = sbr.rel (%p235) target = $region20
        $region19: #{tpu_custom_call.1} parent=11 // pred_region
          _
        $region20: #{tpu_custom_call.1} parent=11 // pred_fallthru
          _
        // Predicated region
        $region21: #{tpu_custom_call.1} parent=11 // pred_check
          %p238 = pneg %p157
        $region22: #{tpu_custom_call.1} parent=11 // pred_check_branch
          %240 = sbr.rel (%p238) target = $region24
        $region23: #{tpu_custom_call.1} parent=11 // pred_region
          %242 = vsyncadd [#allocation10], 0
          %s243 = sshll.u32 %s4, 4
          %s244 = int_to_ptr.hbm [resolvable:$true] %s243
          %s245 = sshll.u32 [#allocation11], 4
          %s246 = int_to_ptr.vmem [resolvable:$true] %s245
          %251 = dma.hbm_to_vmem [thread:$0]  %s244, 128, %s246, [#allocation10], 64, 64, 4
        $region24: #{tpu_custom_call.1} parent=11 // pred_fallthru
          _
        // Predicated region
        $region25: #{tpu_custom_call.1} parent=11 // pred_check
          %p252 = pneg %p178
        $region26: #{tpu_custom_call.1} parent=11 // pred_check_branch
          %254 = sbr.rel (%p252) target = $region28
        $region27: #{tpu_custom_call.1} parent=11 // pred_region
          _
        $region28: #{tpu_custom_call.1} parent=11 // pred_fallthru
          _
      $region12: #{tpu_custom_call.1} parent=5 // pred_fallthru
        _
      %p255 = scmp.lt.s32.totalorder %s19, 2
      // Predicated region
      $region29: #{tpu_custom_call.1} parent=5 // pred_check
        %p256 = pneg %p255
      $region30: #{tpu_custom_call.1} parent=5 // pred_check_branch
        %258 = sbr.rel (%p256) target = $region32
      $region31: #{tpu_custom_call.1} parent=5 // pred_region
        // Predicated region
        $region33: #{tpu_custom_call.1} parent=31 // pred_check
          %p259 = pneg %p60
        $region34: #{tpu_custom_call.1} parent=31 // pred_check_branch
          %261 = sbr.rel (%p259) target = $region36
        $region35: #{tpu_custom_call.1} parent=31 // pred_region
          %p262 = scmp.lt.s32.totalorder %s26, 1
          %s263 = scalar_select %p262, %s26, 1
          %p264 = scmp.lt.s32.totalorder %s27, 0
          %s265 = scalar_select %p264, %s27, 0
          %s266 = smul.addr %s263, 2
          %s267 = sadd.s32 %s265, %s266
          %s268 = smul.addr %s267, 8
          %s269 = scalar_lea.vmem %s0, %s268
        $region36: #{tpu_custom_call.1} parent=31 // pred_fallthru
          _
        // Predicated region
        $region37: #{tpu_custom_call.1} parent=31 // pred_check
          %p270 = pneg %p88
        $region38: #{tpu_custom_call.1} parent=31 // pred_check_branch
          %272 = sbr.rel (%p270) target = $region40
        $region39: #{tpu_custom_call.1} parent=31 // pred_region
          %s273 = sand.u32 %s78, 1
          %s274 = scalar_lea.sflag [#allocation7], %s273
          %s275 = sand.u32 %s78, 1
          %s276 = smul.addr %s275, 16
          %s277 = scalar_lea.vmem [#allocation6], %s276
          %279 = vsyncadd %s274, 0
          %s280 = smul.addr %s26, 2
          %s281 = sadd.s32 %s28, %s280
          %s282 = smul.addr %s281, 8
          %s283 = scalar_lea.hbm %s1, %s282
          %s284 = sshll.u32 %s283, 4
          %s285 = int_to_ptr.hbm [resolvable:$true] %s284
          %s286 = sshll.u32 %s277, 4
          %s287 = int_to_ptr.vmem [resolvable:$true] %s286
          %292 = dma.hbm_to_vmem [thread:$0]  %s285, 256, %s287, %s274, 128, 128, 8
        $region40: #{tpu_custom_call.1} parent=31 // pred_fallthru
          _
      $region32: #{tpu_custom_call.1} parent=5 // pred_fallthru
        _
      %p293 = scmp.le.s32.totalorder 1, %s19
      %p294 = scmp.lt.s32.totalorder %s19, 3
      %p295 = pnand %p293, %p294
      %p296 = pneg %p295
      // Predicated region
      $region41: #{tpu_custom_call.1} parent=5 // pred_check
        _
      $region42: #{tpu_custom_call.1} parent=5 // pred_check_branch
        %298 = sbr.rel (%p295) target = $region44
      $region43: #{tpu_custom_call.1} parent=5 // pred_region
        %s299 = ssub.s32 %s19, 1
        %s300 = sand.u32 %s81, 1
        %s301 = scalar_lea.sflag [#allocation7], %s300
        %s302 = sand.u32 %s81, 1
        %s303 = smul.addr %s302, 16
        %s304 = scalar_lea.vmem [#allocation6], %s303
        // Predicated region
        $region45: #{tpu_custom_call.1} parent=43 // pred_check
          %p305 = pneg %p94
        $region46: #{tpu_custom_call.1} parent=43 // pred_check_branch
          %307 = sbr.rel (%p305) target = $region48
        $region47: #{tpu_custom_call.1} parent=43 // pred_region
          %309 = dma.done %s301, 256
        $region48: #{tpu_custom_call.1} parent=43 // pred_fallthru
          _
        // Predicated region
        $region49: #{tpu_custom_call.1} parent=43 // pred_check
          %p310 = pneg %p115
        $region50: #{tpu_custom_call.1} parent=43 // pred_check_branch
          %312 = sbr.rel (%p310) target = $region52
        $region51: #{tpu_custom_call.1} parent=43 // pred_region
          %314 = dma.done [#allocation10], 128
        $region52: #{tpu_custom_call.1} parent=43 // pred_fallthru
          _
        // Predicated region
        $region53: #{tpu_custom_call.1} parent=43 // pred_check
          %p315 = pneg %p157
        $region54: #{tpu_custom_call.1} parent=43 // pred_check_branch
          %317 = sbr.rel (%p315) target = $region56
        $region55: #{tpu_custom_call.1} parent=43 // pred_region
          %319 = dma.done [#allocation10], 128
        $region56: #{tpu_custom_call.1} parent=43 // pred_fallthru
          _
        %p320 = scmp.lt.s32.totalorder %s29, 1
        %s321 = scalar_select %p320, %s29, 1
        %p322 = scmp.lt.s32.totalorder %s30, 0
        %s323 = scalar_select %p322, %s30, 0
        %s324 = smul.addr %s321, 2
        %s325 = sadd.s32 %s323, %s324
        %s326 = smul.addr %s325, 8
        %s327 = scalar_lea.vmem %s0, %s326
        %p328 = pneg %p66
        %p329 = pneg %p63
        %s330 = sand.u32 %s81, 1
        %s331 = scalar_lea.sflag [#allocation7], %s330
        %s332 = sand.u32 %s81, 1
        %s333 = smul.addr %s332, 16
        %s334 = scalar_lea.vmem [#allocation6], %s333
        %p335 = pneg %p94
        %p336 = pneg %p91
        %p337 = pneg %p115
        %p338 = pneg %p112
        %p339 = pneg %p136
        %p340 = pneg %p133
        %p341 = pneg %p157
        %p342 = pneg %p154
        %p343 = pneg %p178
        %p344 = pneg %p175
        %p345 = pneg %p206
        %p346 = pneg %p203
        %s347 = sand.u32 %s193, 1
        %s348 = scalar_lea.sflag [#allocation8], %s347
        %s349 = sand.u32 %s193, 1
        %s350 = smul.addr %s349, 16
        %s351 = scalar_lea.vmem [#allocation12], %s350
        %p352 = scmp.lt.s32.totalorder %s29, 1
        %s353 = scalar_select %p352, %s29, 1
        %p354 = scmp.lt.s32.totalorder %s30, 0
        %s355 = scalar_select %p354, %s30, 0
        %s356 = smul.addr %s353, 2
        %s357 = sadd.s32 %s355, %s356
        %s358 = smul.addr %s357, 8
        %s359 = scalar_lea.vmem %s0, %s358
        %p361 = scmp.eq.s32.totalorder %s31, 0
        // Predicated region
        $region57: #{tpu_custom_call.1} parent=43 // pred_check
          %p362 = pneg %p361
        $region58: #{tpu_custom_call.1} parent=43 // pred_check_branch
          %364 = sbr.rel (%p362) target = $region60
        $region59: #{tpu_custom_call.1} parent=43 // pred_region
          %v365 = vld [vmem:[%s359] sm:$0xff]
          %v366 = vld [vmem:[%s359 + $0x8] sm:$0xff]
          %v367 = vpack.c.bf16 %v366, %v365
          %v368 = vld [vmem:[#allocation9] sm:$0xf]
          %v369 = vld [vmem:[#allocation9 + $0x4] sm:$0xf]
          %v370 = vld [vmem:[%s3] sm:$0xff]
          %v371 = vld [vmem:[%s3 + $0x8] sm:$0xff]
          %373 = vset.pattern.permute.xlu0 0
          %374 = vperm.xlu0 %373, %v370
          %v375 = vpop.permute.xlu0 %374
          %378 = vset.pattern.permute.xlu0 0
          %379 = vperm.xlu0 %378, %v371
          %v380 = vpop.permute.xlu0 %379
          %v384 = vunpack.c.l.b16 %v368
          %v385 = vunpack.c.l.b16 %v369
          %v386 = vpack.c.b16 %v385, %v384
          %vm387 = vcmask 130048
          %v389 = vsel %vm387, %v386, 0
          %391 = vmatpush.bf16.msra.mxu0 0
          %392 = vmatpush.bf16.msra.mxu0 0
          %393 = vmatpush.bf16.msra.mxu0 0
          %394 = vmatpush.bf16.msra.mxu0 0
          %395 = vmatpush.bf16.msra.mxu0 0
          %396 = vmatpush.bf16.msra.mxu0 0
          %397 = vmatpush.bf16.msra.mxu0 0
          %398 = vmatpush.bf16.msra.mxu0 %v367
          %399 = vmatmul.bf16.gmra.mxu0 %v389
          %v400 = vpop.f32.mrf.mxu0
          %v401 = vadd.f32 %v375, %v400
          %v402 = vpop.f32.mrf.mxu0
          %v403 = vadd.f32 %v380, %v402
          %404 = vdwg.mxu0
          %v405 = vpack.c.bf16 %v401, %v401
          %v406 = vpack.c.bf16 %v403, %v403
          %407 = vst [vmem:[#allocation2] sm:$0xf] %v405
          %408 = vst [vmem:[#allocation2 + $0x4] sm:$0xf] %v406
          %409 = vst [vmem:[#allocation3] sm:$0x1] -inf
          %410 = vst [vmem:[#allocation4] sm:$0x1] 0.0
          %411 = vst [vmem:[#allocation5] sm:$0xff] 0.0
          %412 = vst [vmem:[#allocation5 + $0x8] sm:$0xff] 0.0
        $region60: #{tpu_custom_call.1} parent=43 // pred_fallthru
          _
        %v413 = vld [vmem:[%s304] sm:$0xff]
        %v414 = vld [vmem:[%s304 + $0x8] sm:$0xff]
        %v415 = vpack.c.bf16 %v414, %v413
        %v416 = vld [vmem:[#allocation2] sm:$0xf]
        %v417 = vld [vmem:[#allocation2 + $0x4] sm:$0xf]
        %418 = vxpose.xlu0.c.b16.start [1/8] %v415, 128
        %419 = vxpose.xlu0.c.b16.cont [2/8] 0, 128
        %420 = vxpose.xlu0.c.b16.cont [3/8] 0, 128
        %421 = vxpose.xlu0.c.b16.cont [4/8] 0, 128
        %422 = vxpose.xlu0.c.b16.cont [5/8] 0, 128
        %423 = vxpose.xlu0.c.b16.cont [6/8] 0, 128
        %424 = vxpose.xlu0.c.b16.cont [7/8] 0, 128
        %425 = vxpose.xlu0.c.b16.end [8/8] 0, 128
        %v426 = vpop.trf.xlu0
        %v427 = vpop.trf.xlu0
        %v428 = vpop.trf.xlu0
        %v429 = vpop.trf.xlu0
        %v430 = vpop.trf.xlu0
        %v431 = vpop.trf.xlu0
        %v432 = vpop.trf.xlu0
        %v433 = vpop.trf.xlu0
        %v436 = vunpack.c.l.b16 %v416
        %v437 = vunpack.c.l.b16 %v417
        %v438 = vpack.c.b16 %v437, %v436
        %vm440 = vcmask 130048
        %v442 = vsel %vm440, %v426, 0
        %v445 = vsel %vm440, %v427, 0
        %v448 = vsel %vm440, %v428, 0
        %v451 = vsel %vm440, %v429, 0
        %v454 = vsel %vm440, %v430, 0
        %v457 = vsel %vm440, %v431, 0
        %v460 = vsel %vm440, %v432, 0
        %v463 = vsel %vm440, %v433, 0
        %465 = vmatpush.bf16.msra.mxu0 0
        %466 = vmatpush.bf16.msra.mxu0 0
        %467 = vmatpush.bf16.msra.mxu0 0
        %468 = vmatpush.bf16.msra.mxu0 0
        %469 = vmatpush.bf16.msra.mxu0 0
        %470 = vmatpush.bf16.msra.mxu0 0
        %471 = vmatpush.bf16.msra.mxu0 0
        %472 = vmatpush.bf16.msra.mxu0 %v438
        %473 = vmatmul.bf16.gmra.mxu0 %v442
        %v474 = vpop.f32.mrf.mxu0
        %v475 = vadd.f32 0.0, %v474
        %v476 = vpop.f32.mrf.mxu0
        %v477 = vadd.f32 0.0, %v476
        %478 = vmatmul.bf16.gmra.mxu0 %v445
        %v479 = vpop.f32.mrf.mxu0
        %v480 = vadd.f32 0.0, %v479
        %v481 = vpop.f32.mrf.mxu0
        %v482 = vadd.f32 0.0, %v481
        %483 = vmatmul.bf16.gmra.mxu0 %v448
        %v484 = vpop.f32.mrf.mxu0
        %v485 = vadd.f32 0.0, %v484
        %v486 = vpop.f32.mrf.mxu0
        %v487 = vadd.f32 0.0, %v486
        %488 = vmatmul.bf16.gmra.mxu0 %v451
        %v489 = vpop.f32.mrf.mxu0
        %v490 = vadd.f32 0.0, %v489
        %v491 = vpop.f32.mrf.mxu0
        %v492 = vadd.f32 0.0, %v491
        %493 = vmatmul.bf16.gmra.mxu0 %v454
        %v494 = vpop.f32.mrf.mxu0
        %v495 = vadd.f32 0.0, %v494
        %v496 = vpop.f32.mrf.mxu0
        %v497 = vadd.f32 0.0, %v496
        %498 = vmatmul.bf16.gmra.mxu0 %v457
        %v499 = vpop.f32.mrf.mxu0
        %v500 = vadd.f32 0.0, %v499
        %v501 = vpop.f32.mrf.mxu0
        %v502 = vadd.f32 0.0, %v501
        %503 = vmatmul.bf16.gmra.mxu0 %v460
        %v504 = vpop.f32.mrf.mxu0
        %v505 = vadd.f32 0.0, %v504
        %v506 = vpop.f32.mrf.mxu0
        %v507 = vadd.f32 0.0, %v506
        %508 = vmatmul.bf16.gmra.mxu0 %v463
        %v509 = vpop.f32.mrf.mxu0
        %v510 = vadd.f32 0.0, %v509
        %v511 = vpop.f32.mrf.mxu0
        %v512 = vadd.f32 0.0, %v511
        %513 = vdwg.mxu0
        %v514 = vld [vmem:[#allocation3] sm:$0x1]
        %v515 = vmax.f32 %v475, %v485
        %v516 = vmax.f32 %v477, %v487
        %v517 = vmax.f32 %v480, %v490
        %v518 = vmax.f32 %v482, %v492
        %v519 = vmax.f32 %v515, %v495
        %v520 = vmax.f32 %v516, %v497
        %v521 = vmax.f32 %v517, %v500
        %v522 = vmax.f32 %v518, %v502
        %v523 = vmax.f32 %v519, %v505
        %v524 = vmax.f32 %v520, %v507
        %v525 = vmax.f32 %v521, %v510
        %v526 = vmax.f32 %v522, %v512
        %v527 = vmax.f32 %v523, %v524
        %v528 = vmax.f32 %v525, %v526
        %v529 = vmax.f32 %v527, %v528
        %v530 = vrot.slane %v529, 4
        %v531 = vmax.f32 %v529, %v530
        %v532 = vrot.slane %v531, 2
        %v533 = vmax.f32 %v531, %v532
        %v534 = vrot.slane %v533, 1
        %v535 = vmax.f32 %v533, %v534
        %v536 = vmax.f32 %v514, %v535
        %v537 = vsub.f32 %v514, %v536
        %v538 = vmul.f32 %v537, 1.442695
        %v539 = vpow.pop %v538
        %v541 = vperm.slane %v536, 0
        %v543 = vsub.f32 %v475, %v541
        %v544 = vsub.f32 %v477, %v541
        %v545 = vsub.f32 %v480, %v541
        %v546 = vsub.f32 %v482, %v541
        %v547 = vsub.f32 %v485, %v541
        %v548 = vsub.f32 %v487, %v541
        %v549 = vsub.f32 %v490, %v541
        %v550 = vsub.f32 %v492, %v541
        %v551 = vsub.f32 %v495, %v541
        %v552 = vsub.f32 %v497, %v541
        %v553 = vsub.f32 %v500, %v541
        %v554 = vsub.f32 %v502, %v541
        %v555 = vsub.f32 %v505, %v541
        %v556 = vsub.f32 %v507, %v541
        %v557 = vsub.f32 %v510, %v541
        %v558 = vsub.f32 %v512, %v541
        %v559 = vmul.f32 %v543, 1.442695
        %v560 = vpow.pop %v559
        %v561 = vmul.f32 %v544, 1.442695
        %v562 = vpow.pop %v561
        %v563 = vmul.f32 %v545, 1.442695
        %v564 = vpow.pop %v563
        %v565 = vmul.f32 %v546, 1.442695
        %v566 = vpow.pop %v565
        %v567 = vmul.f32 %v547, 1.442695
        %v568 = vpow.pop %v567
        %v569 = vmul.f32 %v548, 1.442695
        %v570 = vpow.pop %v569
        %v571 = vmul.f32 %v549, 1.442695
        %v572 = vpow.pop %v571
        %v573 = vmul.f32 %v550, 1.442695
        %v574 = vpow.pop %v573
        %v575 = vmul.f32 %v551, 1.442695
        %v576 = vpow.pop %v575
        %v577 = vmul.f32 %v552, 1.442695
        %v578 = vpow.pop %v577
        %v579 = vmul.f32 %v553, 1.442695
        %v580 = vpow.pop %v579
        %v581 = vmul.f32 %v554, 1.442695
        %v582 = vpow.pop %v581
        %v583 = vmul.f32 %v555, 1.442695
        %v584 = vpow.pop %v583
        %v585 = vmul.f32 %v556, 1.442695
        %v586 = vpow.pop %v585
        %v587 = vmul.f32 %v557, 1.442695
        %v588 = vpow.pop %v587
        %v589 = vmul.f32 %v558, 1.442695
        %v590 = vpow.pop %v589
        %v591 = vld [vmem:[#allocation4] sm:$0x1]
        %v592 = vmul.f32 %v539, %v591
        %v593 = vadd.f32 %v560, %v562
        %v594 = vadd.f32 %v593, %v564
        %v595 = vadd.f32 %v594, %v566
        %v596 = vadd.f32 %v595, %v568
        %v597 = vadd.f32 %v596, %v570
        %v598 = vadd.f32 %v597, %v572
        %v599 = vadd.f32 %v598, %v574
        %v600 = vadd.f32 %v599, %v576
        %v601 = vadd.f32 %v600, %v578
        %v602 = vadd.f32 %v601, %v580
        %v603 = vadd.f32 %v602, %v582
        %v604 = vadd.f32 %v603, %v584
        %v605 = vadd.f32 %v604, %v586
        %v606 = vadd.f32 %v605, %v588
        %v607 = vadd.f32 %v606, %v590
        %v608 = vrot.slane %v607, 4
        %v609 = vadd.f32 %v607, %v608
        %v610 = vrot.slane %v609, 2
        %v611 = vadd.f32 %v609, %v610
        %v612 = vrot.slane %v611, 1
        %v613 = vadd.f32 %v611, %v612
        %v614 = vadd.f32 %v592, %v613
        %615 = vst [vmem:[#allocation4] sm:$0x1] %v614
        %616 = vst [vmem:[#allocation3] sm:$0x1] %v536
        %v617 = vld [vmem:[#allocation5] sm:$0xff]
        %v618 = vld [vmem:[#allocation5 + $0x8] sm:$0xff]
        %v620 = vperm.slane %v539, 0
        %v622 = vmul.f32 %v620, %v617
        %v623 = vmul.f32 %v620, %v618
        %v624 = vpack.c.bf16 %v562, %v560
        %v625 = vpack.c.bf16 %v566, %v564
        %v626 = vpack.c.bf16 %v570, %v568
        %v627 = vpack.c.bf16 %v574, %v572
        %v628 = vpack.c.bf16 %v578, %v576
        %v629 = vpack.c.bf16 %v582, %v580
        %v630 = vpack.c.bf16 %v586, %v584
        %v631 = vpack.c.bf16 %v590, %v588
        %632 = vmatpush.bf16.msra.mxu0 %v631
        %633 = vmatpush.bf16.msra.mxu0 %v630
        %634 = vmatpush.bf16.msra.mxu0 %v629
        %635 = vmatpush.bf16.msra.mxu0 %v628
        %636 = vmatpush.bf16.msra.mxu0 %v627
        %637 = vmatpush.bf16.msra.mxu0 %v626
        %638 = vmatpush.bf16.msra.mxu0 %v625
        %639 = vmatpush.bf16.msra.mxu0 %v624
        %640 = vmatmul.bf16.gmra.mxu0 %v415
        %v641 = vpop.f32.mrf.mxu0
        %v642 = vadd.f32 0.0, %v641
        %v643 = vpop.f32.mrf.mxu0
        %v644 = vadd.f32 0.0, %v643
        %645 = vdwg.mxu0
        %v646 = vadd.f32 %v622, %v642
        %v647 = vadd.f32 %v623, %v644
        %648 = vst [vmem:[#allocation5] sm:$0xff] %v646
        %649 = vst [vmem:[#allocation5 + $0x8] sm:$0xff] %v647
        // Predicated region
        $region61: #{tpu_custom_call.1} parent=43 // pred_check
          %p650 = pneg %p361
        $region62: #{tpu_custom_call.1} parent=43 // pred_check_branch
          %652 = sbr.rel (%p650) target = $region64
        $region63: #{tpu_custom_call.1} parent=43 // pred_region
          %v653 = vld [vmem:[#allocation4] sm:$0x1]
          %v654 = vrcp.pop %v653
          %v655 = vld [vmem:[#allocation5] sm:$0xff]
          %v656 = vld [vmem:[#allocation5 + $0x8] sm:$0xff]
          %v658 = vperm.slane %v654, 0
          %v660 = vmul.f32 %v655, %v658
          %v661 = vmul.f32 %v656, %v658
          %v662 = vpack.c.bf16 %v661, %v660
          %v663 = vld [vmem:[#allocation11] sm:$0xf]
          %v664 = vld [vmem:[#allocation11 + $0x4] sm:$0xf]
          %v665 = vld [vmem:[%s5] sm:$0xff]
          %v666 = vld [vmem:[%s5 + $0x8] sm:$0xff]
          %668 = vset.pattern.permute.xlu0 0
          %669 = vperm.xlu0 %668, %v665
          %v670 = vpop.permute.xlu0 %669
          %673 = vset.pattern.permute.xlu0 0
          %674 = vperm.xlu0 %673, %v666
          %v675 = vpop.permute.xlu0 %674
          %v679 = vunpack.c.l.b16 %v663
          %v680 = vunpack.c.l.b16 %v664
          %v681 = vpack.c.b16 %v680, %v679
          %v683 = vsel %vm440, %v681, 0
          %685 = vmatpush.bf16.msra.mxu0 0
          %686 = vmatpush.bf16.msra.mxu0 0
          %687 = vmatpush.bf16.msra.mxu0 0
          %688 = vmatpush.bf16.msra.mxu0 0
          %689 = vmatpush.bf16.msra.mxu0 0
          %690 = vmatpush.bf16.msra.mxu0 0
          %691 = vmatpush.bf16.msra.mxu0 0
          %692 = vmatpush.bf16.msra.mxu0 %v662
          %693 = vmatmul.bf16.gmra.mxu0 %v683
          %v694 = vpop.f32.mrf.mxu0
          %v695 = vadd.f32 %v670, %v694
          %v696 = vpop.f32.mrf.mxu0
          %v697 = vadd.f32 %v675, %v696
          %698 = vdwg.mxu0
          %v699 = vld [vmem:[%s359] sm:$0xff]
          %v700 = vld [vmem:[%s359 + $0x8] sm:$0xff]
          %v701 = vadd.f32 %v695, %v699
          %v702 = vadd.f32 %v697, %v700
          %703 = vst [vmem:[%s351] sm:$0xff] %v701
          %704 = vst [vmem:[%s351 + $0x8] sm:$0xff] %v702
        $region64: #{tpu_custom_call.1} parent=43 // pred_fallthru
          _
        %s705 = sand.u32 %s193, 1
        %s706 = scalar_lea.sflag [#allocation8], %s705
        %s707 = sand.u32 %s193, 1
        %s708 = smul.addr %s707, 16
        %s709 = scalar_lea.vmem [#allocation12], %s708
        // Predicated region
        $region65: #{tpu_custom_call.1} parent=43 // pred_check
          %p710 = pneg %p203
        $region66: #{tpu_custom_call.1} parent=43 // pred_check_branch
          %712 = sbr.rel (%p710) target = $region68
        $region67: #{tpu_custom_call.1} parent=43 // pred_region
          %714 = vsyncadd %s706, 0
          %s715 = smul.addr %s29, 2
          %s716 = sadd.s32 %s30, %s715
          %s717 = smul.addr %s716, 8
          %s718 = scalar_lea.hbm %s6, %s717
          %s719 = sshll.u32 %s709, 4
          %s720 = int_to_ptr.vmem [resolvable:$true] %s719
          %s721 = sshll.u32 %s718, 4
          %s722 = int_to_ptr.hbm [resolvable:$true] %s721
          %727 = dma.vmem_to_hbm [thread:$0]  %s720, 256, %s722, %s706, 128, 128, 8
        $region68: #{tpu_custom_call.1} parent=43 // pred_fallthru
          _
      $region44: #{tpu_custom_call.1} parent=5 // pred_fallthru
        _
      %p728 = scmp.le.s32.totalorder 2, %s19
      // Predicated region
      $region69: #{tpu_custom_call.1} parent=5 // pred_check
        %p729 = pneg %p728
      $region70: #{tpu_custom_call.1} parent=5 // pred_check_branch
        %731 = sbr.rel (%p729) target = $region72
      $region71: #{tpu_custom_call.1} parent=5 // pred_region
        %s732 = ssub.s32 %s19, 2
        // Predicated region
        $region73: #{tpu_custom_call.1} parent=71 // pred_check
          %p733 = pneg %p209
        $region74: #{tpu_custom_call.1} parent=71 // pred_check_branch
          %735 = sbr.rel (%p733) target = $region76
        $region75: #{tpu_custom_call.1} parent=71 // pred_region
          %s736 = sand.u32 %s194, 1
          %s737 = scalar_lea.sflag [#allocation8], %s736
          %s738 = sand.u32 %s194, 1
          %s739 = smul.addr %s738, 16
          %s740 = scalar_lea.vmem [#allocation12], %s739
          %742 = dma.done %s737, 256
        $region76: #{tpu_custom_call.1} parent=71 // pred_fallthru
          _
      $region72: #{tpu_custom_call.1} parent=5 // pred_fallthru
        _
    $region6: #{tpu_custom_call.1} parent=1 // loop_footer
      %s23 = sadd.s32 1, %s19
    $region7: #{tpu_custom_call.1} parent=1 // loop_footer_branch
      %18 = sbr.rel target = $region3
    $region8: #{tpu_custom_call.1} parent=1 // loop_exit
      _
    %743 = vsyncpa [#allocation7], 1
    %s744 = scalar_lea.sflag [#allocation7], 1
    %745 = vsyncpa %s744, 1
    %746 = vsyncpa [#allocation10], 1
    %747 = vsyncpa [#allocation8], 1
    %s748 = scalar_lea.sflag [#allocation8], 1
    %749 = vsyncpa %s748, 1

</llo_original>
